<compile_context>
chip_gen: v6e
topology: v6e:2x2x1
jax: 0.10.0
libtpu: 0.0.40
codegen_flags: <defaults>
</compile_context>

<pallas_src>
import functools

import jax
import jax.numpy as jnp
from jax.experimental import pallas as pl
from jax.experimental.pallas import tpu as pltpu

OUTPUT_DIM = 256
MAX_EFFECTORS = 2
H1, H2 = 32, 64          # effector-encoder hidden sizes
GH = 256                 # global-encoder hidden size
MAX_BATCH_TILE = 1024    # rows per grid step, upper bound


def _ee_kernel(x_ref,
               w1_ref, b1_ref, w2_ref, b2_ref,
               wf_ref, bf_ref, wg2_ref, bg2_ref,
               out_ref, *, compute_dtype):
    """One batch tile, entirely in VMEM, 4 straight-line matmuls.

    x_ref   : (Bt, E)
    w1_ref  : (E, E*32)      b1_ref : (1, E*32)
    w2_ref  : (E*32, E*64)   b2_ref : (1, E*64)
    wf_ref  : (E*64, 256)    bf_ref : (1, 256)     (w3 folded into wg1)
    wg2_ref : (256, D)       bg2_ref: (1, D)
    out_ref : (Bt, D)
    """
    x = x_ref[...].astype(compute_dtype)                          # (Bt, E)

    h1 = jnp.maximum(
        jnp.dot(x, w1_ref[...], preferred_element_type=jnp.float32)
        + b1_ref[...], 0.0).astype(compute_dtype)                 # (Bt, E*32)

    h2 = jnp.maximum(
        jnp.dot(h1, w2_ref[...], preferred_element_type=jnp.float32)
        + b2_ref[...], 0.0).astype(compute_dtype)                 # (Bt, E*64)

    g = jnp.maximum(
        jnp.dot(h2, wf_ref[...], preferred_element_type=jnp.float32)
        + bf_ref[...], 0.0).astype(compute_dtype)                 # (Bt, 256)

    out = jnp.dot(g, wg2_ref[...], preferred_element_type=jnp.float32) \
        + bg2_ref[...]                                            # (Bt, D)
    out_ref[...] = out.astype(out_ref.dtype)


def init_params(key, output_dim: int = OUTPUT_DIM,
                max_effectors: int = MAX_EFFECTORS):
    """Deterministic synthetic parameters (PyTorch-like uniform fan-in init)."""
    def linear(key, fan_in, fan_out):
        kw, kb = jax.random.split(key)
        bound = 1.0 / jnp.sqrt(jnp.float32(fan_in))
        w = jax.random.uniform(kw, (fan_in, fan_out), jnp.float32, -bound, bound)
        b = jax.random.uniform(kb, (1, fan_out), jnp.float32, -bound, bound)
        return w, b

    ks = jax.random.split(key, 5)
    w1, b1 = linear(ks[0], 1, H1)
    w2, b2 = linear(ks[1], H1, H2)
    w3, b3 = linear(ks[2], H2, H2)
    wg1, bg1 = linear(ks[3], H2 * max_effectors, GH)
    wg2, bg2 = linear(ks[4], GH, output_dim)
    return (w1, b1, w2, b2, w3, b3, wg1, bg1, wg2, bg2)


def _fuse_params(params, max_effectors: int, compute_dtype):
    """Build trace-time fused weights.

    * W1_blk (E, E*32) block-diagonal of w1, b1 tiled      -> one K=E matmul.
    * W2_blk (E*32, E*64) block-diagonal of w2, b2 tiled   -> one K=E*32 matmul.
    * Wf (E*64, 256): row-stack of (w3 @ wg1_i), bf = bg1 + sum_i b3 @ wg1_i
      (folds Linear(64,64) and the concat into the global Linear(64*E,256)).
    Exact in math:  cat_i(h2_i @ w3 + b3) @ wg1 + bg1
                  = sum_i h2_i @ (w3 @ wg1_i) + (bg1 + sum_i b3 @ wg1_i).
    """
    w1, b1, w2, b2, w3, b3, wg1, bg1, wg2, bg2 = params
    E = max_effectors

    w1_blk = jnp.zeros((E, E * H1), jnp.float32)
    w2_blk = jnp.zeros((E * H1, E * H2), jnp.float32)
    for i in range(E):
        w1_blk = w1_blk.at[i:i + 1, i * H1:(i + 1) * H1].set(w1)
        w2_blk = w2_blk.at[i * H1:(i + 1) * H1, i * H2:(i + 1) * H2].set(w2)
    b1_t = jnp.tile(b1, (1, E))                                   # (1, E*32)
    b2_t = jnp.tile(b2, (1, E))                                   # (1, E*64)

    wf = jnp.concatenate([w3 @ wg1[i * H2:(i + 1) * H2, :]
                          for i in range(E)], axis=0)             # (E*64, 256)
    bf = bg1 + sum(b3 @ wg1[i * H2:(i + 1) * H2, :]
                   for i in range(E))                             # (1, 256)

    # Weights in compute dtype; biases stay f32 (added to f32 accumulators).
    cd = compute_dtype
    return (w1_blk.astype(cd), b1_t, w2_blk.astype(cd), b2_t,
            wf.astype(cd), bf, wg2.astype(cd), bg2)


def _round_up(x: int, m: int) -> int:
    return -(-x // m) * m


def _pick_batch_tile(batch: int, max_tile: int = MAX_BATCH_TILE) -> int:
    """Small batch -> minimal tile; large batch -> >=2 grid steps (v7x), <=1024."""
    if batch <= 256:
        return _round_up(batch, 8)
    tile = _round_up(-(-batch // 2), 256)          # aim for two grid steps
    return max(256, min(max_tile, tile))


def end_effector_encoder(x, params, *, output_dim: int = OUTPUT_DIM,
                         max_effectors: int = MAX_EFFECTORS,
                         use_bf16: bool = False):
    """x: (batch, max_effectors) f32 -> (batch, output_dim) f32."""
    assert x.ndim == 2 and x.shape[1] == max_effectors
    batch = x.shape[0]
    compute_dtype = jnp.bfloat16 if use_bf16 else jnp.float32

    batch_tile = _pick_batch_tile(batch)
    n_blocks = -(-batch // batch_tile)              # ceil div
    padded = n_blocks * batch_tile

    x_p = x.astype(compute_dtype)
    if padded != batch:
        x_p = jnp.pad(x_p, ((0, padded - batch), (0, 0)))

    fused = _fuse_params(params, max_effectors, compute_dtype)

    kernel = functools.partial(_ee_kernel, compute_dtype=compute_dtype)

    # Weights: whole-array, VMEM-resident, not pipelined (block never changes).
    resident = pl.BlockSpec(memory_space=pltpu.MemorySpace.VMEM)
    in_specs = [pl.BlockSpec((batch_tile, max_effectors), lambda i: (i, 0))]
    in_specs += [resident] * len(fused)

    out = pl.pallas_call(
        kernel,
        out_shape=jax.ShapeDtypeStruct((padded, output_dim), jnp.float32),
        grid=(n_blocks,),
        in_specs=in_specs,
        out_specs=pl.BlockSpec((batch_tile, output_dim), lambda i: (i, 0)),
        compiler_params=pltpu.CompilerParams(
            dimension_semantics=("parallel",)),
    )(x_p, *fused)

    return out if padded == batch else out[:batch]


def _reference(x, params, max_effectors=MAX_EFFECTORS):
    """Pure-JAX reference mirroring the PyTorch forward (eval mode)."""
    w1, b1, w2, b2, w3, b3, wg1, bg1, wg2, bg2 = params
    feats = []
    for i in range(max_effectors):
        s = x[:, i:i + 1]
        h = jnp.maximum(s @ w1 + b1, 0.0)
        h = jnp.maximum(h @ w2 + b2, 0.0)
        h = h @ w3 + b3
        feats.append(h)
    cat = jnp.concatenate(feats, axis=1)
    g = jnp.maximum(cat @ wg1 + bg1, 0.0)
    return g @ wg2 + bg2


if __name__ == "__main__":
    key = jax.random.PRNGKey(0)
    kx, kp = jax.random.split(key)

    batch = 2
    x = jax.random.normal(kx, (batch, MAX_EFFECTORS), jnp.float32)
    params = init_params(kp)

    out = end_effector_encoder(x, params)
    out = jax.block_until_ready(out)

    ref = _reference(x, params)
    assert out.shape == (batch, OUTPUT_DIM), out.shape
    assert jnp.allclose(out, ref, atol=1e-4, rtol=1e-4), \
        float(jnp.max(jnp.abs(out - ref)))

    print("KERNEL_OK")
</pallas_src>

<mosaic_0001>
module attributes {stable_mosaic.version = 11 : i64} {
  func.func @_ee_kernel(%arg0: i32, %arg1: memref<8x2xf32, #tpu.memory_space<vmem>>, %arg2: memref<2x64xf32, #tpu.memory_space<vmem>>, %arg3: memref<1x64xf32, #tpu.memory_space<vmem>>, %arg4: memref<64x128xf32, #tpu.memory_space<vmem>>, %arg5: memref<1x128xf32, #tpu.memory_space<vmem>>, %arg6: memref<128x256xf32, #tpu.memory_space<vmem>>, %arg7: memref<1x256xf32, #tpu.memory_space<vmem>>, %arg8: memref<256x256xf32, #tpu.memory_space<vmem>>, %arg9: memref<1x256xf32, #tpu.memory_space<vmem>>, %arg10: memref<8x256xf32, #tpu.memory_space<vmem>>) attributes {dimension_semantics = [#tpu.dimension_semantics<parallel>], iteration_bounds = array<i64: 1>, scalar_prefetch = 0 : i64, scratch_operands = 0 : i64, tpu.core_type = #tpu.core_type<tc>, window_params = [{transform_indices = @transform_0, window_bounds = array<i64: 8, 2>}, {pipeline_mode = #tpu.pipeline_mode<synchronous>, transform_indices = @transform_1, window_bounds = array<i64: 2, 64>}, {pipeline_mode = #tpu.pipeline_mode<synchronous>, transform_indices = @transform_2, window_bounds = array<i64: 1, 64>}, {pipeline_mode = #tpu.pipeline_mode<synchronous>, transform_indices = @transform_3, window_bounds = array<i64: 64, 128>}, {pipeline_mode = #tpu.pipeline_mode<synchronous>, transform_indices = @transform_4, window_bounds = array<i64: 1, 128>}, {pipeline_mode = #tpu.pipeline_mode<synchronous>, transform_indices = @transform_5, window_bounds = array<i64: 128, 256>}, {pipeline_mode = #tpu.pipeline_mode<synchronous>, transform_indices = @transform_6, window_bounds = array<i64: 1, 256>}, {pipeline_mode = #tpu.pipeline_mode<synchronous>, transform_indices = @transform_7, window_bounds = array<i64: 256, 256>}, {pipeline_mode = #tpu.pipeline_mode<synchronous>, transform_indices = @transform_8, window_bounds = array<i64: 1, 256>}, {transform_indices = @transform_9, window_bounds = array<i64: 8, 256>}]} {
    %c0 = arith.constant 0 : index
    %c0_0 = arith.constant 0 : index
    %0 = vector.load %arg1[%c0, %c0_0] : memref<8x2xf32, #tpu.memory_space<vmem>>, vector<8x2xf32>
    %c0_1 = arith.constant 0 : index
    %c0_2 = arith.constant 0 : index
    %1 = vector.load %arg2[%c0_1, %c0_2] : memref<2x64xf32, #tpu.memory_space<vmem>>, vector<2x64xf32>
    %cst = arith.constant dense<0.000000e+00> : vector<8x64xf32>
    %2 = tpu.matmul %0, %1, %cst {dimension_numbers = #tpu.dot_dimension_numbers<[1], [0], [0], [1], [0, 0, 1, 1], [], []>} : vector<8x2xf32>, vector<2x64xf32>, vector<8x64xf32> -> vector<8x64xf32>
    %c0_3 = arith.constant 0 : index
    %c0_4 = arith.constant 0 : index
    %3 = vector.load %arg3[%c0_3, %c0_4] : memref<1x64xf32, #tpu.memory_space<vmem>>, vector<1x64xf32>
    %4 = vector.broadcast %3 : vector<1x64xf32> to vector<8x64xf32>
    %5 = arith.addf %2, %4 : vector<8x64xf32>
    %cst_5 = arith.constant 0.000000e+00 : f32
    %6 = vector.broadcast %cst_5 : f32 to vector<8x64xf32>
    %7 = arith.maximumf %5, %6 : vector<8x64xf32>
    %c0_6 = arith.constant 0 : index
    %c0_7 = arith.constant 0 : index
    %8 = vector.load %arg4[%c0_6, %c0_7] : memref<64x128xf32, #tpu.memory_space<vmem>>, vector<64x128xf32>
    %cst_8 = arith.constant dense<0.000000e+00> : vector<8x128xf32>
    %9 = tpu.matmul %7, %8, %cst_8 {dimension_numbers = #tpu.dot_dimension_numbers<[1], [0], [0], [1], [0, 0, 1, 1], [], []>} : vector<8x64xf32>, vector<64x128xf32>, vector<8x128xf32> -> vector<8x128xf32>
    %c0_9 = arith.constant 0 : index
    %c0_10 = arith.constant 0 : index
    %10 = vector.load %arg5[%c0_9, %c0_10] : memref<1x128xf32, #tpu.memory_space<vmem>>, vector<1x128xf32>
    %11 = vector.broadcast %10 : vector<1x128xf32> to vector<8x128xf32>
    %12 = arith.addf %9, %11 : vector<8x128xf32>
    %cst_11 = arith.constant 0.000000e+00 : f32
    %13 = vector.broadcast %cst_11 : f32 to vector<8x128xf32>
    %14 = arith.maximumf %12, %13 : vector<8x128xf32>
    %c0_12 = arith.constant 0 : index
    %c0_13 = arith.constant 0 : index
    %15 = vector.load %arg6[%c0_12, %c0_13] : memref<128x256xf32, #tpu.memory_space<vmem>>, vector<128x256xf32>
    %cst_14 = arith.constant dense<0.000000e+00> : vector<8x256xf32>
    %16 = tpu.matmul %14, %15, %cst_14 {dimension_numbers = #tpu.dot_dimension_numbers<[1], [0], [0], [1], [0, 0, 1, 1], [], []>} : vector<8x128xf32>, vector<128x256xf32>, vector<8x256xf32> -> vector<8x256xf32>
    %c0_15 = arith.constant 0 : index
    %c0_16 = arith.constant 0 : index
    %17 = vector.load %arg7[%c0_15, %c0_16] : memref<1x256xf32, #tpu.memory_space<vmem>>, vector<1x256xf32>
    %18 = vector.broadcast %17 : vector<1x256xf32> to vector<8x256xf32>
    %19 = arith.addf %16, %18 : vector<8x256xf32>
    %cst_17 = arith.constant 0.000000e+00 : f32
    %20 = vector.broadcast %cst_17 : f32 to vector<8x256xf32>
    %21 = arith.maximumf %19, %20 : vector<8x256xf32>
    %c0_18 = arith.constant 0 : index
    %c0_19 = arith.constant 0 : index
    %22 = vector.load %arg8[%c0_18, %c0_19] : memref<256x256xf32, #tpu.memory_space<vmem>>, vector<256x256xf32>
    %cst_20 = arith.constant dense<0.000000e+00> : vector<8x256xf32>
    %23 = tpu.matmul %21, %22, %cst_20 {dimension_numbers = #tpu.dot_dimension_numbers<[1], [0], [0], [1], [0, 0, 1, 1], [], []>} : vector<8x256xf32>, vector<256x256xf32>, vector<8x256xf32> -> vector<8x256xf32>
    %c0_21 = arith.constant 0 : index
    %c0_22 = arith.constant 0 : index
    %24 = vector.load %arg9[%c0_21, %c0_22] : memref<1x256xf32, #tpu.memory_space<vmem>>, vector<1x256xf32>
    %25 = vector.broadcast %24 : vector<1x256xf32> to vector<8x256xf32>
    %26 = arith.addf %23, %25 : vector<8x256xf32>
    %c0_23 = arith.constant 0 : index
    %c0_24 = arith.constant 0 : index
    %27 = vector.load %arg10[%c0_23, %c0_24] : memref<8x256xf32, #tpu.memory_space<vmem>>, vector<8x256xf32>
    tpu.vector_store %arg10[%c0_23, %c0_24], %26 {strides = array<i32>} : memref<8x256xf32, #tpu.memory_space<vmem>>, vector<8x256xf32>,
    return
  }
  func.func @transform_0(%arg0: i32) -> (i32, i32) {
    %c0_i32 = arith.constant 0 : i32
    %c0_i32_0 = arith.constant 0 : i32
    return %arg0, %c0_i32 : i32, i32
  }
  func.func @transform_1(%arg0: i32) -> (i32, i32) {
    %c0_i32 = arith.constant 0 : i32
    %c0_i32_0 = arith.constant 0 : i32
    %c0_i32_1 = arith.constant 0 : i32
    return %c0_i32, %c0_i32_0 : i32, i32
  }
  func.func @transform_2(%arg0: i32) -> (i32, i32) {
    %c0_i32 = arith.constant 0 : i32
    %c0_i32_0 = arith.constant 0 : i32
    %c0_i32_1 = arith.constant 0 : i32
    return %c0_i32, %c0_i32_0 : i32, i32
  }
  func.func @transform_3(%arg0: i32) -> (i32, i32) {
    %c0_i32 = arith.constant 0 : i32
    %c0_i32_0 = arith.constant 0 : i32
    %c0_i32_1 = arith.constant 0 : i32
    return %c0_i32, %c0_i32_0 : i32, i32
  }
  func.func @transform_4(%arg0: i32) -> (i32, i32) {
    %c0_i32 = arith.constant 0 : i32
    %c0_i32_0 = arith.constant 0 : i32
    %c0_i32_1 = arith.constant 0 : i32
    return %c0_i32, %c0_i32_0 : i32, i32
  }
  func.func @transform_5(%arg0: i32) -> (i32, i32) {
    %c0_i32 = arith.constant 0 : i32
    %c0_i32_0 = arith.constant 0 : i32
    %c0_i32_1 = arith.constant 0 : i32
    return %c0_i32, %c0_i32_0 : i32, i32
  }
  func.func @transform_6(%arg0: i32) -> (i32, i32) {
    %c0_i32 = arith.constant 0 : i32
    %c0_i32_0 = arith.constant 0 : i32
    %c0_i32_1 = arith.constant 0 : i32
    return %c0_i32, %c0_i32_0 : i32, i32
  }
  func.func @transform_7(%arg0: i32) -> (i32, i32) {
    %c0_i32 = arith.constant 0 : i32
    %c0_i32_0 = arith.constant 0 : i32
    %c0_i32_1 = arith.constant 0 : i32
    return %c0_i32, %c0_i32_0 : i32, i32
  }
  func.func @transform_8(%arg0: i32) -> (i32, i32) {
    %c0_i32 = arith.constant 0 : i32
    %c0_i32_0 = arith.constant 0 : i32
    %c0_i32_1 = arith.constant 0 : i32
    return %c0_i32, %c0_i32_0 : i32, i32
  }
  func.func @transform_9(%arg0: i32) -> (i32, i32) {
    %c0_i32 = arith.constant 0 : i32
    %c0_i32_0 = arith.constant 0 : i32
    return %arg0, %c0_i32 : i32, i32
  }
}

</mosaic_0001>

<llo_original>
// kernel: tpu_custom_call.1
$region0: #{tpu_custom_call.1}
  #allocation0 [shape = 'u32[]', space=smem, size = 0x4, offset = 0x4, fixed_abs, tag = 'smem constant byte address 0x4 - core index']
  #allocation1 [shape = 'u32[144,128]{1,0:T(1,128)}', space=vmem, size = 0x12000, scoped, tag = 'internal scratch']
  %s0 = inlined_call_operand.vmem [shape: f32[8,2], index: 0, kind: input, shape index: {}]
  %s1 = inlined_call_operand.vmem [shape: f32[2,64], index: 1, kind: input, shape index: {}]
  %s2 = inlined_call_operand.vmem [shape: f32[1,64], index: 2, kind: input, shape index: {}]
  %s3 = inlined_call_operand.hbm [shape: f32[64,128], index: 3, kind: input, shape index: {}]
  %s4 = inlined_call_operand.vmem [shape: f32[1,128], index: 4, kind: input, shape index: {}]
  %s5 = inlined_call_operand.hbm [shape: f32[128,256], index: 5, kind: input, shape index: {}]
  %s6 = inlined_call_operand.vmem [shape: f32[1,256], index: 6, kind: input, shape index: {}]
  %s7 = inlined_call_operand.hbm [shape: f32[256,256], index: 7, kind: input, shape index: {}]
  %s8 = inlined_call_operand.vmem [shape: f32[1,256], index: 8, kind: input, shape index: {}]
  %s9 = inlined_call_operand.hbm [shape: f32[8,256], index: 9, kind: output, shape index: {}]
  %s10 = sld [smem:[#allocation0]]
  $region58: #{tpu_custom_call.1} parent=0
    _
  %s12 = ssub.s32 1, %s10
  %s13 = scalar_select 0, %s12, %s10
  $region1: #{tpu_custom_call.1} parent=0
    #allocation2 [shape = 'u8[32768]{0}', space=vmem, size = 0x8000, scoped, tag = 'input window, operand 3, single buffered']
    #allocation3 [shape = 's32[1]{0}', space=sflag, size = 0x4, scoped, tag = 'scoped memory for tpu_custom_call.1']
    #allocation4 [shape = 's32[1]{0}', space=sflag, size = 0x4, scoped, tag = 'scoped memory for tpu_custom_call.1']
    #allocation5 [shape = 'u8[131072]{0}', space=vmem, size = 0x20000, scoped, tag = 'input window, operand 5, single buffered']
    #allocation6 [shape = 's32[1]{0}', space=sflag, size = 0x4, scoped, tag = 'scoped memory for tpu_custom_call.1']
    #allocation7 [shape = 'u8[262144]{0}', space=vmem, size = 0x40000, scoped, tag = 'input window, operand 7, single buffered']
    #allocation8 [shape = 'u8[8192]{0}', space=vmem, size = 0x2000, scoped, tag = 'output window, operand 0, single buffered']
    %14 = vsyncpa [#allocation3], 0
    %15 = vsyncpa [#allocation6], 0
    %16 = vsyncpa [#allocation4], 0
    // Predicated region
    $region2: #{tpu_custom_call.1} parent=1 // pred_check
      _
    $region3: #{tpu_custom_call.1} parent=1 // pred_check_branch
      %18 = sbr.rel (0) target = $region5
    $region4: #{tpu_custom_call.1} parent=1 // pred_region
      _
    $region5: #{tpu_custom_call.1} parent=1 // pred_fallthru
      _
    // Predicated region
    $region6: #{tpu_custom_call.1} parent=1 // pred_check
      _
    $region7: #{tpu_custom_call.1} parent=1 // pred_check_branch
      %20 = sbr.rel (0) target = $region9
    $region8: #{tpu_custom_call.1} parent=1 // pred_region
      _
    $region9: #{tpu_custom_call.1} parent=1 // pred_fallthru
      _
    // Predicated region
    $region10: #{tpu_custom_call.1} parent=1 // pred_check
      _
    $region11: #{tpu_custom_call.1} parent=1 // pred_check_branch
      %22 = sbr.rel (0) target = $region13
    $region12: #{tpu_custom_call.1} parent=1 // pred_region
      _
    $region13: #{tpu_custom_call.1} parent=1 // pred_fallthru
      _
    // Predicated region
    $region14: #{tpu_custom_call.1} parent=1 // pred_check
      _
    $region15: #{tpu_custom_call.1} parent=1 // pred_check_branch
      %24 = sbr.rel (0) target = $region17
    $region16: #{tpu_custom_call.1} parent=1 // pred_region
      %s26 = ssub.s32 1024, 1024
      %27 = vsyncadd [#allocation3], %s26
      %s28 = sshll.u32 [#allocation2], 4
      %s29 = int_to_ptr.vmem [resolvable:$true] %s28
      %34 = dma.hbm_to_vmem [thread:$0]  %s3, 1024, %s29, [#allocation3], 128, 128, 8
    $region17: #{tpu_custom_call.1} parent=1 // pred_fallthru
      _
    // Predicated region
    $region18: #{tpu_custom_call.1} parent=1 // pred_check
      _
    $region19: #{tpu_custom_call.1} parent=1 // pred_check_branch
      %36 = sbr.rel (0) target = $region21
    $region20: #{tpu_custom_call.1} parent=1 // pred_region
      _
    $region21: #{tpu_custom_call.1} parent=1 // pred_fallthru
      _
    // Predicated region
    $region22: #{tpu_custom_call.1} parent=1 // pred_check
      _
    $region23: #{tpu_custom_call.1} parent=1 // pred_check_branch
      %38 = sbr.rel (0) target = $region25
    $region24: #{tpu_custom_call.1} parent=1 // pred_region
      %s40 = ssub.s32 4096, 4096
      %41 = vsyncadd [#allocation6], %s40
      %s42 = sshll.u32 [#allocation5], 4
      %s43 = int_to_ptr.vmem [resolvable:$true] %s42
      %48 = dma.hbm_to_vmem [thread:$0]  %s5, 4096, %s43, [#allocation6], 256, 256, 16
    $region25: #{tpu_custom_call.1} parent=1 // pred_fallthru
      _
    // Predicated region
    $region26: #{tpu_custom_call.1} parent=1 // pred_check
      _
    $region27: #{tpu_custom_call.1} parent=1 // pred_check_branch
      %50 = sbr.rel (0) target = $region29
    $region28: #{tpu_custom_call.1} parent=1 // pred_region
      _
    $region29: #{tpu_custom_call.1} parent=1 // pred_fallthru
      _
    // Predicated region
    $region30: #{tpu_custom_call.1} parent=1 // pred_check
      _
    $region31: #{tpu_custom_call.1} parent=1 // pred_check_branch
      %52 = sbr.rel (0) target = $region33
    $region32: #{tpu_custom_call.1} parent=1 // pred_region
      %s54 = ssub.s32 8192, 8192
      %55 = vsyncadd [#allocation6], %s54
      %s56 = sshll.u32 [#allocation7], 4
      %s57 = int_to_ptr.vmem [resolvable:$true] %s56
      %62 = dma.hbm_to_vmem [thread:$0]  %s7, 8192, %s57, [#allocation6], 256, 256, 16
    $region33: #{tpu_custom_call.1} parent=1 // pred_fallthru
      _
    // Predicated region
    $region34: #{tpu_custom_call.1} parent=1 // pred_check
      _
    $region35: #{tpu_custom_call.1} parent=1 // pred_check_branch
      %64 = sbr.rel (0) target = $region37
    $region36: #{tpu_custom_call.1} parent=1 // pred_region
      _
    $region37: #{tpu_custom_call.1} parent=1 // pred_fallthru
      _
    // Predicated region
    $region38: #{tpu_custom_call.1} parent=1 // pred_check
      _
    $region39: #{tpu_custom_call.1} parent=1 // pred_check_branch
      %66 = sbr.rel (0) target = $region41
    $region40: #{tpu_custom_call.1} parent=1 // pred_region
      %67 = dma.done [#allocation3], 1024
    $region41: #{tpu_custom_call.1} parent=1 // pred_fallthru
      _
    // Predicated region
    $region42: #{tpu_custom_call.1} parent=1 // pred_check
      _
    $region43: #{tpu_custom_call.1} parent=1 // pred_check_branch
      %69 = sbr.rel (0) target = $region45
    $region44: #{tpu_custom_call.1} parent=1 // pred_region
      %70 = dma.done [#allocation6], 4096
    $region45: #{tpu_custom_call.1} parent=1 // pred_fallthru
      _
    // Predicated region
    $region46: #{tpu_custom_call.1} parent=1 // pred_check
      _
    $region47: #{tpu_custom_call.1} parent=1 // pred_check_branch
      %72 = sbr.rel (0) target = $region49
    $region48: #{tpu_custom_call.1} parent=1 // pred_region
      %73 = dma.done [#allocation6], 8192
    $region49: #{tpu_custom_call.1} parent=1 // pred_fallthru
      _
    %v74 = vld [vmem:[%s0] sm:$0xff]
    %v75 = vld [vmem:[%s1] sm:$0x3]
    %v76 = vld [vmem:[%s2] sm:$0x1]
    %v78 = vlaneseq
    %v79 = vshrl.u32 %v78, 7
    %v80 = vsub.s32 0, %v79
    %v81 = vrot.slane %v76, %v80
    %vm83 = vcmask 15360
    %v85 = vsel %vm83, %v74, 0
    %vm87 = vcmask 1041408
    %v89 = vsel %vm87, %v75, 0
    %91 = vmatprep.subr.mxu0 0.0
    %92 = vmatpush1.msra.mxu0 0.0
    %93 = vmatprep.subr.mxu0 0.0
    %94 = vmatpush1.msra.mxu0 0.0
    %95 = vmatprep.subr.mxu0 0.0
    %96 = vmatpush1.msra.mxu0 0.0
    %97 = vmatprep.subr.mxu0 0.0
    %98 = vmatpush1.msra.mxu0 0.0
    %99 = vmatprep.subr.mxu0 0.0
    %100 = vmatpush1.msra.mxu0 0.0
    %101 = vmatprep.subr.mxu0 0.0
    %102 = vmatpush1.msra.mxu0 0.0
    %103 = vmatprep.subr.mxu0 0.0
    %104 = vmatpush1.msra.mxu0 0.0
    %105 = vmatprep.subr.mxu0 0.0
    %106 = vmatpush1.msra.mxu0 0.0
    %107 = vmatprep.subr.mxu0 0.0
    %108 = vmatpush1.msra.mxu0 0.0
    %109 = vmatprep.subr.mxu0 0.0
    %110 = vmatpush1.msra.mxu0 0.0
    %111 = vmatprep.subr.mxu0 0.0
    %112 = vmatpush1.msra.mxu0 0.0
    %113 = vmatprep.subr.mxu0 0.0
    %114 = vmatpush1.msra.mxu0 0.0
    %115 = vmatprep.subr.mxu0 0.0
    %116 = vmatpush1.msra.mxu0 0.0
    %117 = vmatprep.subr.mxu0 0.0
    %118 = vmatpush1.msra.mxu0 0.0
    %119 = vmatprep.subr.mxu0 0.0
    %120 = vmatpush1.msra.mxu0 0.0
    %121 = vmatprep.subr.mxu0 0.0
    %122 = vmatpush1.msra.mxu0 %v89
    %123 = vmatprep.subr.mxu0 0.0
    %124 = vmatpush2.msra.mxu0 0.0
    %125 = vmatprep.subr.mxu0 0.0
    %126 = vmatpush2.msra.mxu0 0.0
    %127 = vmatprep.subr.mxu0 0.0
    %128 = vmatpush2.msra.mxu0 0.0
    %129 = vmatprep.subr.mxu0 0.0
    %130 = vmatpush2.msra.mxu0 0.0
    %131 = vmatprep.subr.mxu0 0.0
    %132 = vmatpush2.msra.mxu0 0.0
    %133 = vmatprep.subr.mxu0 0.0
    %134 = vmatpush2.msra.mxu0 0.0
    %135 = vmatprep.subr.mxu0 0.0
    %136 = vmatpush2.msra.mxu0 0.0
    %137 = vmatprep.subr.mxu0 0.0
    %138 = vmatpush2.msra.mxu0 0.0
    %139 = vmatprep.subr.mxu0 0.0
    %140 = vmatpush2.msra.mxu0 0.0
    %141 = vmatprep.subr.mxu0 0.0
    %142 = vmatpush2.msra.mxu0 0.0
    %143 = vmatprep.subr.mxu0 0.0
    %144 = vmatpush2.msra.mxu0 0.0
    %145 = vmatprep.subr.mxu0 0.0
    %146 = vmatpush2.msra.mxu0 0.0
    %147 = vmatprep.subr.mxu0 0.0
    %148 = vmatpush2.msra.mxu0 0.0
    %149 = vmatprep.subr.mxu0 0.0
    %150 = vmatpush2.msra.mxu0 0.0
    %151 = vmatprep.subr.mxu0 0.0
    %152 = vmatpush2.msra.mxu0 0.0
    %153 = vmatprep.subr.mxu0 0.0
    %154 = vmatpush2.msra.mxu0 0.0
    %155 = vmatprep.mubr.f32.mxu0 0.0
    %156 = vmatmul.mubr.f32.gmra.mxu0 %v85
    %v157 = vpop.f32.mrf.mxu0
    %v158 = vadd.f32 %v81, %v157
    %v159 = vpop.f32.mrf.mxu0
    %160 = vdwg.mxu0
    %v161 = vmax.f32 %v158, 0.0
    %v162 = vld [vmem:[#allocation2] sm:$0xff]
    %v163 = vld [vmem:[#allocation2 + $0x8] sm:$0xff]
    %v164 = vld [vmem:[#allocation2 + $0x10] sm:$0xff]
    %v165 = vld [vmem:[#allocation2 + $0x18] sm:$0xff]
    %v166 = vld [vmem:[#allocation2 + $0x20] sm:$0xff]
    %v167 = vld [vmem:[#allocation2 + $0x28] sm:$0xff]
    %v168 = vld [vmem:[#allocation2 + $0x30] sm:$0xff]
    %v169 = vld [vmem:[#allocation2 + $0x38] sm:$0xff]
    %v170 = vld [vmem:[%s4] sm:$0x1]
    %v172 = vlaneseq
    %v173 = vshrl.u32 %v172, 7
    %v174 = vsub.s32 0, %v173
    %v175 = vrot.slane %v170, %v174
    %vm177 = vcmask 523264
    %v179 = vsel %vm177, %v161, 0
    %181 = vmatprep.subr.mxu0 0.0
    %182 = vmatpush1.msra.mxu0 0.0
    %183 = vmatprep.subr.mxu0 0.0
    %184 = vmatpush1.msra.mxu0 0.0
    %185 = vmatprep.subr.mxu0 0.0
    %186 = vmatpush1.msra.mxu0 0.0
    %187 = vmatprep.subr.mxu0 0.0
    %188 = vmatpush1.msra.mxu0 0.0
    %189 = vmatprep.subr.mxu0 0.0
    %190 = vmatpush1.msra.mxu0 0.0
    %191 = vmatprep.subr.mxu0 0.0
    %192 = vmatpush1.msra.mxu0 0.0
    %193 = vmatprep.subr.mxu0 0.0
    %194 = vmatpush1.msra.mxu0 0.0
    %195 = vmatprep.subr.mxu0 0.0
    %196 = vmatpush1.msra.mxu0 0.0
    %197 = vmatprep.subr.mxu0 0.0
    %198 = vmatpush1.msra.mxu0 %v169
    %199 = vmatprep.subr.mxu0 0.0
    %200 = vmatpush1.msra.mxu0 %v168
    %201 = vmatprep.subr.mxu0 0.0
    %202 = vmatpush1.msra.mxu0 %v167
    %203 = vmatprep.subr.mxu0 0.0
    %204 = vmatpush1.msra.mxu0 %v166
    %205 = vmatprep.subr.mxu0 0.0
    %206 = vmatpush1.msra.mxu0 %v165
    %207 = vmatprep.subr.mxu0 0.0
    %208 = vmatpush1.msra.mxu0 %v164
    %209 = vmatprep.subr.mxu0 0.0
    %210 = vmatpush1.msra.mxu0 %v163
    %211 = vmatprep.subr.mxu0 0.0
    %212 = vmatpush1.msra.mxu0 %v162
    %213 = vmatprep.subr.mxu0 0.0
    %214 = vmatpush2.msra.mxu0 0.0
    %215 = vmatprep.subr.mxu0 0.0
    %216 = vmatpush2.msra.mxu0 0.0
    %217 = vmatprep.subr.mxu0 0.0
    %218 = vmatpush2.msra.mxu0 0.0
    %219 = vmatprep.subr.mxu0 0.0
    %220 = vmatpush2.msra.mxu0 0.0
    %221 = vmatprep.subr.mxu0 0.0
    %222 = vmatpush2.msra.mxu0 0.0
    %223 = vmatprep.subr.mxu0 0.0
    %224 = vmatpush2.msra.mxu0 0.0
    %225 = vmatprep.subr.mxu0 0.0
    %226 = vmatpush2.msra.mxu0 0.0
    %227 = vmatprep.subr.mxu0 0.0
    %228 = vmatpush2.msra.mxu0 0.0
    %229 = vmatprep.subr.mxu0 0.0
    %230 = vmatpush2.msra.mxu0 0.0
    %231 = vmatprep.subr.mxu0 0.0
    %232 = vmatpush2.msra.mxu0 0.0
    %233 = vmatprep.subr.mxu0 0.0
    %234 = vmatpush2.msra.mxu0 0.0
    %235 = vmatprep.subr.mxu0 0.0
    %236 = vmatpush2.msra.mxu0 0.0
    %237 = vmatprep.subr.mxu0 0.0
    %238 = vmatpush2.msra.mxu0 0.0
    %239 = vmatprep.subr.mxu0 0.0
    %240 = vmatpush2.msra.mxu0 0.0
    %241 = vmatprep.subr.mxu0 0.0
    %242 = vmatpush2.msra.mxu0 0.0
    %243 = vmatprep.subr.mxu0 0.0
    %244 = vmatpush2.msra.mxu0 0.0
    %245 = vmatprep.mubr.f32.mxu0 0.0
    %246 = vmatmul.mubr.f32.gmra.mxu0 %v179
    %v247 = vpop.f32.mrf.mxu0
    %v248 = vadd.f32 %v175, %v247
    %v249 = vpop.f32.mrf.mxu0
    %250 = vdwg.mxu0
    %v251 = vmax.f32 %v248, 0.0
    %v252 = vld [vmem:[#allocation5] sm:$0xff]
    %v253 = vld [vmem:[#allocation5 + $0x8] sm:$0xff]
    %v254 = vld [vmem:[#allocation5 + $0x10] sm:$0xff]
    %v255 = vld [vmem:[#allocation5 + $0x18] sm:$0xff]
    %v256 = vld [vmem:[#allocation5 + $0x20] sm:$0xff]
    %v257 = vld [vmem:[#allocation5 + $0x28] sm:$0xff]
    %v258 = vld [vmem:[#allocation5 + $0x30] sm:$0xff]
    %v259 = vld [vmem:[#allocation5 + $0x38] sm:$0xff]
    %v260 = vld [vmem:[#allocation5 + $0x40] sm:$0xff]
    %v261 = vld [vmem:[#allocation5 + $0x48] sm:$0xff]
    %v262 = vld [vmem:[#allocation5 + $0x50] sm:$0xff]
    %v263 = vld [vmem:[#allocation5 + $0x58] sm:$0xff]
    %v264 = vld [vmem:[#allocation5 + $0x60] sm:$0xff]
    %v265 = vld [vmem:[#allocation5 + $0x68] sm:$0xff]
    %v266 = vld [vmem:[#allocation5 + $0x70] sm:$0xff]
    %v267 = vld [vmem:[#allocation5 + $0x78] sm:$0xff]
    %v268 = vld [vmem:[#allocation5 + $0x80] sm:$0xff]
    %v269 = vld [vmem:[#allocation5 + $0x88] sm:$0xff]
    %v270 = vld [vmem:[#allocation5 + $0x90] sm:$0xff]
    %v271 = vld [vmem:[#allocation5 + $0x98] sm:$0xff]
    %v272 = vld [vmem:[#allocation5 + $0xa0] sm:$0xff]
    %v273 = vld [vmem:[#allocation5 + $0xa8] sm:$0xff]
    %v274 = vld [vmem:[#allocation5 + $0xb0] sm:$0xff]
    %v275 = vld [vmem:[#allocation5 + $0xb8] sm:$0xff]
    %v276 = vld [vmem:[#allocation5 + $0xc0] sm:$0xff]
    %v277 = vld [vmem:[#allocation5 + $0xc8] sm:$0xff]
    %v278 = vld [vmem:[#allocation5 + $0xd0] sm:$0xff]
    %v279 = vld [vmem:[#allocation5 + $0xd8] sm:$0xff]
    %v280 = vld [vmem:[#allocation5 + $0xe0] sm:$0xff]
    %v281 = vld [vmem:[#allocation5 + $0xe8] sm:$0xff]
    %v282 = vld [vmem:[#allocation5 + $0xf0] sm:$0xff]
    %v283 = vld [vmem:[#allocation5 + $0xf8] sm:$0xff]
    %v284 = vld [vmem:[%s6] sm:$0x3]
    %v286 = vlaneseq
    %v287 = vshrl.u32 %v286, 7
    %v288 = vsub.s32 0, %v287
    %v289 = vrot.slane %v284, %v288
    %v290 = vlaneseq
    %v291 = vshrl.u32 %v290, 7
    %v292 = vsub.s32 1, %v291
    %v293 = vrot.slane %v284, %v292
    %296 = vmatprep.subr.mxu0 %v283
    %297 = vmatpush1.msra.mxu0 %v282
    %298 = vmatprep.subr.mxu0 %v281
    %299 = vmatpush1.msra.mxu0 %v280
    %300 = vmatprep.subr.mxu0 %v279
    %301 = vmatpush1.msra.mxu0 %v278
    %302 = vmatprep.subr.mxu0 %v277
    %303 = vmatpush1.msra.mxu0 %v276
    %304 = vmatprep.subr.mxu0 %v275
    %305 = vmatpush1.msra.mxu0 %v274
    %306 = vmatprep.subr.mxu0 %v273
    %307 = vmatpush1.msra.mxu0 %v272
    %308 = vmatprep.subr.mxu0 %v271
    %309 = vmatpush1.msra.mxu0 %v270
    %310 = vmatprep.subr.mxu0 %v269
    %311 = vmatpush1.msra.mxu0 %v268
    %312 = vmatprep.subr.mxu0 %v267
    %313 = vmatpush1.msra.mxu0 %v266
    %314 = vmatprep.subr.mxu0 %v265
    %315 = vmatpush1.msra.mxu0 %v264
    %316 = vmatprep.subr.mxu0 %v263
    %317 = vmatpush1.msra.mxu0 %v262
    %318 = vmatprep.subr.mxu0 %v261
    %319 = vmatpush1.msra.mxu0 %v260
    %320 = vmatprep.subr.mxu0 %v259
    %321 = vmatpush1.msra.mxu0 %v258
    %322 = vmatprep.subr.mxu0 %v257
    %323 = vmatpush1.msra.mxu0 %v256
    %324 = vmatprep.subr.mxu0 %v255
    %325 = vmatpush1.msra.mxu0 %v254
    %326 = vmatprep.subr.mxu0 %v253
    %327 = vmatpush1.msra.mxu0 %v252
    %328 = vmatprep.subr.mxu0 0.0
    %329 = vmatpush2.msra.mxu0 0.0
    %330 = vmatprep.subr.mxu0 0.0
    %331 = vmatpush2.msra.mxu0 0.0
    %332 = vmatprep.subr.mxu0 0.0
    %333 = vmatpush2.msra.mxu0 0.0
    %334 = vmatprep.subr.mxu0 0.0
    %335 = vmatpush2.msra.mxu0 0.0
    %336 = vmatprep.subr.mxu0 0.0
    %337 = vmatpush2.msra.mxu0 0.0
    %338 = vmatprep.subr.mxu0 0.0
    %339 = vmatpush2.msra.mxu0 0.0
    %340 = vmatprep.subr.mxu0 0.0
    %341 = vmatpush2.msra.mxu0 0.0
    %342 = vmatprep.subr.mxu0 0.0
    %343 = vmatpush2.msra.mxu0 0.0
    %344 = vmatprep.subr.mxu0 0.0
    %345 = vmatpush2.msra.mxu0 0.0
    %346 = vmatprep.subr.mxu0 0.0
    %347 = vmatpush2.msra.mxu0 0.0
    %348 = vmatprep.subr.mxu0 0.0
    %349 = vmatpush2.msra.mxu0 0.0
    %350 = vmatprep.subr.mxu0 0.0
    %351 = vmatpush2.msra.mxu0 0.0
    %352 = vmatprep.subr.mxu0 0.0
    %353 = vmatpush2.msra.mxu0 0.0
    %354 = vmatprep.subr.mxu0 0.0
    %355 = vmatpush2.msra.mxu0 0.0
    %356 = vmatprep.subr.mxu0 0.0
    %357 = vmatpush2.msra.mxu0 0.0
    %358 = vmatprep.subr.mxu0 0.0
    %359 = vmatpush2.msra.mxu0 0.0
    %360 = vmatprep.mubr.f32.mxu0 0.0
    %361 = vmatmul.mubr.f32.gmra.mxu0 %v251
    %v362 = vpop.f32.mrf.mxu0
    %v363 = vadd.f32 %v289, %v362
    %v364 = vpop.f32.mrf.mxu0
    %v365 = vadd.f32 %v293, %v364
    %366 = vdwg.mxu0
    %v367 = vmax.f32 %v363, 0.0
    %v368 = vmax.f32 %v365, 0.0
    %v369 = vld [vmem:[#allocation7] sm:$0xff]
    %v370 = vld [vmem:[#allocation7 + $0x8] sm:$0xff]
    %v371 = vld [vmem:[#allocation7 + $0x10] sm:$0xff]
    %v372 = vld [vmem:[#allocation7 + $0x18] sm:$0xff]
    %v373 = vld [vmem:[#allocation7 + $0x20] sm:$0xff]
    %v374 = vld [vmem:[#allocation7 + $0x28] sm:$0xff]
    %v375 = vld [vmem:[#allocation7 + $0x30] sm:$0xff]
    %v376 = vld [vmem:[#allocation7 + $0x38] sm:$0xff]
    %v377 = vld [vmem:[#allocation7 + $0x40] sm:$0xff]
    %v378 = vld [vmem:[#allocation7 + $0x48] sm:$0xff]
    %v379 = vld [vmem:[#allocation7 + $0x50] sm:$0xff]
    %v380 = vld [vmem:[#allocation7 + $0x58] sm:$0xff]
    %v381 = vld [vmem:[#allocation7 + $0x60] sm:$0xff]
    %v382 = vld [vmem:[#allocation7 + $0x68] sm:$0xff]
    %v383 = vld [vmem:[#allocation7 + $0x70] sm:$0xff]
    %v384 = vld [vmem:[#allocation7 + $0x78] sm:$0xff]
    %v385 = vld [vmem:[#allocation7 + $0x80] sm:$0xff]
    %v386 = vld [vmem:[#allocation7 + $0x88] sm:$0xff]
    %v387 = vld [vmem:[#allocation7 + $0x90] sm:$0xff]
    %v388 = vld [vmem:[#allocation7 + $0x98] sm:$0xff]
    %v389 = vld [vmem:[#allocation7 + $0xa0] sm:$0xff]
    %v390 = vld [vmem:[#allocation7 + $0xa8] sm:$0xff]
    %v391 = vld [vmem:[#allocation7 + $0xb0] sm:$0xff]
    %v392 = vld [vmem:[#allocation7 + $0xb8] sm:$0xff]
    %v393 = vld [vmem:[#allocation7 + $0xc0] sm:$0xff]
    %v394 = vld [vmem:[#allocation7 + $0xc8] sm:$0xff]
    %v395 = vld [vmem:[#allocation7 + $0xd0] sm:$0xff]
    %v396 = vld [vmem:[#allocation7 + $0xd8] sm:$0xff]
    %v397 = vld [vmem:[#allocation7 + $0xe0] sm:$0xff]
    %v398 = vld [vmem:[#allocation7 + $0xe8] sm:$0xff]
    %v399 = vld [vmem:[#allocation7 + $0xf0] sm:$0xff]
    %v400 = vld [vmem:[#allocation7 + $0xf8] sm:$0xff]
    %v401 = vld [vmem:[#allocation7 + $0x100] sm:$0xff]
    %v402 = vld [vmem:[#allocation7 + $0x108] sm:$0xff]
    %v403 = vld [vmem:[#allocation7 + $0x110] sm:$0xff]
    %v404 = vld [vmem:[#allocation7 + $0x118] sm:$0xff]
    %v405 = vld [vmem:[#allocation7 + $0x120] sm:$0xff]
    %v406 = vld [vmem:[#allocation7 + $0x128] sm:$0xff]
    %v407 = vld [vmem:[#allocation7 + $0x130] sm:$0xff]
    %v408 = vld [vmem:[#allocation7 + $0x138] sm:$0xff]
    %v409 = vld [vmem:[#allocation7 + $0x140] sm:$0xff]
    %v410 = vld [vmem:[#allocation7 + $0x148] sm:$0xff]
    %v411 = vld [vmem:[#allocation7 + $0x150] sm:$0xff]
    %v412 = vld [vmem:[#allocation7 + $0x158] sm:$0xff]
    %v413 = vld [vmem:[#allocation7 + $0x160] sm:$0xff]
    %v414 = vld [vmem:[#allocation7 + $0x168] sm:$0xff]
    %v415 = vld [vmem:[#allocation7 + $0x170] sm:$0xff]
    %v416 = vld [vmem:[#allocation7 + $0x178] sm:$0xff]
    %v417 = vld [vmem:[#allocation7 + $0x180] sm:$0xff]
    %v418 = vld [vmem:[#allocation7 + $0x188] sm:$0xff]
    %v419 = vld [vmem:[#allocation7 + $0x190] sm:$0xff]
    %v420 = vld [vmem:[#allocation7 + $0x198] sm:$0xff]
    %v421 = vld [vmem:[#allocation7 + $0x1a0] sm:$0xff]
    %v422 = vld [vmem:[#allocation7 + $0x1a8] sm:$0xff]
    %v423 = vld [vmem:[#allocation7 + $0x1b0] sm:$0xff]
    %v424 = vld [vmem:[#allocation7 + $0x1b8] sm:$0xff]
    %v425 = vld [vmem:[#allocation7 + $0x1c0] sm:$0xff]
    %v426 = vld [vmem:[#allocation7 + $0x1c8] sm:$0xff]
    %v427 = vld [vmem:[#allocation7 + $0x1d0] sm:$0xff]
    %v428 = vld [vmem:[#allocation7 + $0x1d8] sm:$0xff]
    %v429 = vld [vmem:[#allocation7 + $0x1e0] sm:$0xff]
    %v430 = vld [vmem:[#allocation7 + $0x1e8] sm:$0xff]
    %v431 = vld [vmem:[#allocation7 + $0x1f0] sm:$0xff]
    %v432 = vld [vmem:[#allocation7 + $0x1f8] sm:$0xff]
    %v433 = vld [vmem:[%s8] sm:$0x3]
    %v435 = vlaneseq
    %v436 = vshrl.u32 %v435, 7
    %v437 = vsub.s32 0, %v436
    %v438 = vrot.slane %v433, %v437
    %v439 = vlaneseq
    %v440 = vshrl.u32 %v439, 7
    %v441 = vsub.s32 1, %v440
    %v442 = vrot.slane %v433, %v441
    %445 = vmatprep.subr.mxu0 %v400
    %446 = vmatpush1.msra.mxu0 %v399
    %447 = vmatprep.subr.mxu0 %v398
    %448 = vmatpush1.msra.mxu0 %v397
    %449 = vmatprep.subr.mxu0 %v396
    %450 = vmatpush1.msra.mxu0 %v395
    %451 = vmatprep.subr.mxu0 %v394
    %452 = vmatpush1.msra.mxu0 %v393
    %453 = vmatprep.subr.mxu0 %v392
    %454 = vmatpush1.msra.mxu0 %v391
    %455 = vmatprep.subr.mxu0 %v390
    %456 = vmatpush1.msra.mxu0 %v389
    %457 = vmatprep.subr.mxu0 %v388
    %458 = vmatpush1.msra.mxu0 %v387
    %459 = vmatprep.subr.mxu0 %v386
    %460 = vmatpush1.msra.mxu0 %v385
    %461 = vmatprep.subr.mxu0 %v384
    %462 = vmatpush1.msra.mxu0 %v383
    %463 = vmatprep.subr.mxu0 %v382
    %464 = vmatpush1.msra.mxu0 %v381
    %465 = vmatprep.subr.mxu0 %v380
    %466 = vmatpush1.msra.mxu0 %v379
    %467 = vmatprep.subr.mxu0 %v378
    %468 = vmatpush1.msra.mxu0 %v377
    %469 = vmatprep.subr.mxu0 %v376
    %470 = vmatpush1.msra.mxu0 %v375
    %471 = vmatprep.subr.mxu0 %v374
    %472 = vmatpush1.msra.mxu0 %v373
    %473 = vmatprep.subr.mxu0 %v372
    %474 = vmatpush1.msra.mxu0 %v371
    %475 = vmatprep.subr.mxu0 %v370
    %476 = vmatpush1.msra.mxu0 %v369
    %477 = vmatprep.subr.mxu0 %v432
    %478 = vmatpush2.msra.mxu0 %v431
    %479 = vmatprep.subr.mxu0 %v430
    %480 = vmatpush2.msra.mxu0 %v429
    %481 = vmatprep.subr.mxu0 %v428
    %482 = vmatpush2.msra.mxu0 %v427
    %483 = vmatprep.subr.mxu0 %v426
    %484 = vmatpush2.msra.mxu0 %v425
    %485 = vmatprep.subr.mxu0 %v424
    %486 = vmatpush2.msra.mxu0 %v423
    %487 = vmatprep.subr.mxu0 %v422
    %488 = vmatpush2.msra.mxu0 %v421
    %489 = vmatprep.subr.mxu0 %v420
    %490 = vmatpush2.msra.mxu0 %v419
    %491 = vmatprep.subr.mxu0 %v418
    %492 = vmatpush2.msra.mxu0 %v417
    %493 = vmatprep.subr.mxu0 %v416
    %494 = vmatpush2.msra.mxu0 %v415
    %495 = vmatprep.subr.mxu0 %v414
    %496 = vmatpush2.msra.mxu0 %v413
    %497 = vmatprep.subr.mxu0 %v412
    %498 = vmatpush2.msra.mxu0 %v411
    %499 = vmatprep.subr.mxu0 %v410
    %500 = vmatpush2.msra.mxu0 %v409
    %501 = vmatprep.subr.mxu0 %v408
    %502 = vmatpush2.msra.mxu0 %v407
    %503 = vmatprep.subr.mxu0 %v406
    %504 = vmatpush2.msra.mxu0 %v405
    %505 = vmatprep.subr.mxu0 %v404
    %506 = vmatpush2.msra.mxu0 %v403
    %507 = vmatprep.subr.mxu0 %v402
    %508 = vmatpush2.msra.mxu0 %v401
    %509 = vmatprep.mubr.f32.mxu0 %v368
    %510 = vmatmul.mubr.f32.gmra.mxu0 %v367
    %v511 = vpop.f32.mrf.mxu0
    %v512 = vadd.f32 %v438, %v511
    %v513 = vpop.f32.mrf.mxu0
    %v514 = vadd.f32 %v442, %v513
    %515 = vdwg.mxu0
    %516 = vst [vmem:[#allocation8] sm:$0xff] %v512
    %517 = vst [vmem:[#allocation8 + $0x8] sm:$0xff] %v514
    // Predicated region
    $region50: #{tpu_custom_call.1} parent=1 // pred_check
      _
    $region51: #{tpu_custom_call.1} parent=1 // pred_check_branch
      %519 = sbr.rel (0) target = $region53
    $region52: #{tpu_custom_call.1} parent=1 // pred_region
      %s521 = ssub.s32 256, 256
      %522 = vsyncadd [#allocation4], %s521
      %s524 = sshll.u32 [#allocation8], 4
      %s525 = int_to_ptr.vmem [resolvable:$true] %s524
      %527 = dma.vmem_to_hbm [thread:$0]  %s525, 256, %s9, [#allocation4]
    $region53: #{tpu_custom_call.1} parent=1 // pred_fallthru
      _
    // Predicated region
    $region54: #{tpu_custom_call.1} parent=1 // pred_check
      _
    $region55: #{tpu_custom_call.1} parent=1 // pred_check_branch
      %529 = sbr.rel (0) target = $region57
    $region56: #{tpu_custom_call.1} parent=1 // pred_region
      %530 = dma.done [#allocation4], 256
    $region57: #{tpu_custom_call.1} parent=1 // pred_fallthru
      _
    %531 = vsyncpa [#allocation3], 1
    %532 = vsyncpa [#allocation6], 1
    %533 = vsyncpa [#allocation4], 1

</llo_original>
